<compile_context>
chip_gen: v7x
topology: tpu7x:2x2x1
jax: 0.10.0
libtpu: 0.0.40
codegen_flags: <defaults>
</compile_context>

<pallas_src>
import functools

import jax
import jax.numpy as jnp
import numpy as np
from jax.experimental import pallas as pl
from jax.experimental.pallas import tpu as pltpu


def _shift_flat(x2d, s):
    """y[:, m] = x2d[:, m + s] for 0 <= m + s < M, else 0 (static shift s)."""
    cin, m = x2d.shape
    if s == 0:
        return x2d
    zeros = jnp.zeros((cin, abs(s)), dtype=x2d.dtype)
    if s > 0:
        return jnp.concatenate([x2d[:, s:], zeros], axis=1)
    return jnp.concatenate([zeros, x2d[:, :m + s]], axis=1)


def _conv_bn_relu6_kernel(x_ref, w_ref, scale_ref, bias_ref, o_ref, col_ref,
                          *, H, W, K, cin, cin_pad):
    # x_ref:     (1, Cin, M)           flattened NCHW image (M = H*W on lanes)
    # w_ref:     (Cout, K*K*cin_pad)   conv weight, tap-major, ci zero-padded
    # scale_ref: (Cout, 1)             folded BN scale = gamma / sqrt(var+eps)
    # bias_ref:  (Cout, 1)             folded BN bias  = beta - mean * scale
    # o_ref:     (1, Cout, M)          lane-dense output tile
    # col_ref:   (K*K*cin_pad, M)      VMEM im2col scratch
    M = H * W
    pad = K // 2
    dtype = col_ref.dtype

    x2d = x_ref[0].astype(dtype)                         # (Cin, M), lane-dense

    # Zero the scratch so the ci-padding rows (and stale VMEM) are exactly 0.
    col_ref[...] = jnp.zeros(col_ref.shape, col_ref.dtype)

    # Only the W (column) boundary needs masking; the H boundary is handled
    # by the zero fill of the flat shift.
    col_idx = jax.lax.broadcasted_iota(jnp.int32, (cin, M), 1) % W

    # Build the im2col block: row (kh*K + kw)*cin_pad + ci holds
    # x_padded[ci, h + kh - pad, w + kw - pad] for output position m = h*W + w.
    for kh in range(K):
        for kw in range(K):
            dh, dw = kh - pad, kw - pad
            patch = _shift_flat(x2d, dh * W + dw)        # (Cin, M)
            if dw != 0:
                valid = (col_idx + dw >= 0) & (col_idx + dw < W)
                patch = jnp.where(valid, patch, jnp.zeros_like(patch))
            base = (kh * K + kw) * cin_pad
            col_ref[base:base + cin, :] = patch          # 8-aligned row offset

    # One MXU matmul: (Cout, K*K*cin_pad) x (K*K*cin_pad, M) -> (Cout, M).
    acc = jnp.dot(w_ref[...], col_ref[...],
                  preferred_element_type=jnp.float32)

    # Folded BatchNorm (inference) + ReLU6, in f32, on the lane-dense tile.
    y = acc * scale_ref[...] + bias_ref[...]
    o_ref[0] = jnp.clip(y, 0.0, 6.0).astype(o_ref.dtype)


def conv_layer_forward(x_nchw, weight_oihw, gamma, beta, running_mean,
                       running_var, eps=1e-5, *, compute_dtype=jnp.float32):
    """ConvLayer forward: Conv2d(k, stride=1, padding=k//2, groups=1, no bias)
    -> BatchNorm2d (inference, running stats) -> ReLU6.  NCHW in / NCHW out."""
    N, Cin, H, W = x_nchw.shape
    Cout, _, K, K2 = weight_oihw.shape
    assert K == K2
    M = H * W
    cin_pad = ((Cin + 7) // 8) * 8          # pad contraction channels to a sublane tile
    kkc = K * K * cin_pad

    # Free (metadata-only) reshape: keep NCHW, put flattened spatial on lanes.
    x_flat = x_nchw.reshape(N, Cin, M)

    # Tiny one-time parameter transforms (negligible; precomputed in practice).
    # weight OIHW -> (Cout, tap, ci) -> zero-pad ci -> (Cout, K*K*cin_pad).
    w_t = jnp.transpose(weight_oihw, (0, 2, 3, 1)).reshape(Cout, K * K, Cin)
    w_t = jnp.pad(w_t, ((0, 0), (0, 0), (0, cin_pad - Cin)))
    w2 = w_t.reshape(Cout, kkc).astype(compute_dtype)

    scale = (gamma / jnp.sqrt(running_var + eps)).astype(jnp.float32)
    bias = (beta - running_mean * scale).astype(jnp.float32)
    scale2d = scale.reshape(Cout, 1)
    bias2d = bias.reshape(Cout, 1)

    kernel = functools.partial(_conv_bn_relu6_kernel, H=H, W=W, K=K,
                               cin=Cin, cin_pad=cin_pad)

    cost = pl.CostEstimate(
        flops=2 * N * M * K * K * Cin * Cout,
        transcendentals=0,
        bytes_accessed=4 * (x_flat.size + w2.size + scale2d.size
                            + bias2d.size + N * Cout * M))

    out_flat = pl.pallas_call(
        kernel,
        out_shape=jax.ShapeDtypeStruct((N, Cout, M), jnp.float32),
        grid_spec=pltpu.PrefetchScalarGridSpec(
            num_scalar_prefetch=0,
            grid=(N,),
            in_specs=[
                pl.BlockSpec((1, Cin, M), lambda n: (n, 0, 0)),
                pl.BlockSpec((Cout, kkc), lambda n: (0, 0)),
                pl.BlockSpec((Cout, 1), lambda n: (0, 0)),
                pl.BlockSpec((Cout, 1), lambda n: (0, 0)),
            ],
            out_specs=pl.BlockSpec((1, Cout, M), lambda n: (n, 0, 0)),
            scratch_shapes=[pltpu.VMEM((kkc, M), compute_dtype)],
        ),
        compiler_params=pltpu.CompilerParams(
            dimension_semantics=("parallel",)),
        cost_estimate=cost,
    )(x_flat, w2, scale2d, bias2d)

    # Free (metadata-only) reshape back to NCHW.
    return out_flat.reshape(N, Cout, H, W)


def _reference_forward(x_nchw, weight_oihw, gamma, beta, running_mean,
                       running_var, eps=1e-5):
    """Pure-JAX reference (matches PyTorch eval-mode ConvLayer)."""
    y = jax.lax.conv_general_dilated(
        x_nchw, weight_oihw,
        window_strides=(1, 1), padding="SAME",
        dimension_numbers=("NCHW", "OIHW", "NCHW"))
    scale = (gamma / jnp.sqrt(running_var + eps)).reshape(1, -1, 1, 1)
    bias = (beta - running_mean * gamma / jnp.sqrt(running_var + eps)).reshape(1, -1, 1, 1)
    y = y * scale + bias
    return jnp.clip(y, 0.0, 6.0)


if __name__ == "__main__":
    # Small shapes consistent with the module: batch=2, Cin=4, Cout=8, 16x16.
    N, Cin, Cout, H, W, K = 2, 4, 8, 16, 16, 3

    key = jax.random.PRNGKey(0)
    kx, kw, kg, kb, km, kv = jax.random.split(key, 6)

    x = jax.random.normal(kx, (N, Cin, H, W), dtype=jnp.float32)
    weight = jax.random.normal(kw, (Cout, Cin, K, K), dtype=jnp.float32) * 0.2
    # BatchNorm parameters (deterministic, inference-mode running stats).
    gamma = jax.random.uniform(kg, (Cout,), minval=0.5, maxval=1.5)
    beta = jax.random.normal(kb, (Cout,)) * 0.1
    running_mean = jax.random.normal(km, (Cout,)) * 0.1
    running_var = jax.random.uniform(kv, (Cout,), minval=0.5, maxval=1.5)
    # TODO(synk): training-mode BatchNorm (batch statistics + running-stat
    # updates) is not implemented; inference semantics with running stats used.

    out = conv_layer_forward(x, weight, gamma, beta, running_mean, running_var)
    out = jax.block_until_ready(out)

    ref = _reference_forward(x, weight, gamma, beta, running_mean, running_var)
    np.testing.assert_allclose(np.asarray(out), np.asarray(ref),
                               rtol=1e-5, atol=1e-5)
    print("KERNEL_OK")
</pallas_src>

<mosaic_0001>
module attributes {stable_mosaic.version = 11 : i64} {
  func.func @_conv_bn_relu6_kernel(%arg0: i32, %arg1: memref<1x4x256xf32, #tpu.memory_space<vmem>>, %arg2: memref<8x72xf32, #tpu.memory_space<vmem>>, %arg3: memref<8x1xf32, #tpu.memory_space<vmem>>, %arg4: memref<8x1xf32, #tpu.memory_space<vmem>>, %arg5: memref<1x8x256xf32, #tpu.memory_space<vmem>>, %arg6: memref<72x256xf32, #tpu.memory_space<vmem>>) attributes {dimension_semantics = [#tpu.dimension_semantics<parallel>], iteration_bounds = array<i64: 2>, scalar_prefetch = 0 : i64, scratch_operands = 1 : i64, tpu.core_type = #tpu.core_type<tc>, window_params = [{transform_indices = @transform_0, window_bounds = array<i64: 1, 4, 256>}, {pipeline_mode = #tpu.pipeline_mode<synchronous>, transform_indices = @transform_1, window_bounds = array<i64: 8, 72>}, {pipeline_mode = #tpu.pipeline_mode<synchronous>, transform_indices = @transform_2, window_bounds = array<i64: 8, 1>}, {pipeline_mode = #tpu.pipeline_mode<synchronous>, transform_indices = @transform_3, window_bounds = array<i64: 8, 1>}, {transform_indices = @transform_4, window_bounds = array<i64: 1, 8, 256>}]} {
    %c0 = arith.constant 0 : index
    %c0_0 = arith.constant 0 : index
    %c0_1 = arith.constant 0 : index
    %0 = vector.load %arg1[%c0, %c0_0, %c0_1] : memref<1x4x256xf32, #tpu.memory_space<vmem>>, vector<1x4x256xf32>
    %1 = vector.shape_cast %0 : vector<1x4x256xf32> to vector<4x256xf32>
    %cst = arith.constant 0.000000e+00 : f32
    %2 = vector.broadcast %cst : f32 to vector<72x256xf32>
    %c0_2 = arith.constant 0 : index
    %c0_3 = arith.constant 0 : index
    %3 = vector.load %arg6[%c0_2, %c0_3] : memref<72x256xf32, #tpu.memory_space<vmem>>, vector<72x256xf32>
    tpu.vector_store %arg6[%c0_2, %c0_3], %2 {strides = array<i32>} : memref<72x256xf32, #tpu.memory_space<vmem>>, vector<72x256xf32>,
    %4 = tpu.iota {dimensions = array<i32: 1>} : vector<4x256xi32>
    %c16_i32 = arith.constant 16 : i32
    %c0_i32 = arith.constant 0 : i32
    %5 = arith.cmpi eq, %c16_i32, %c0_i32 : i32
    %c1_i32 = arith.constant 1 : i32
    %6 = arith.select %5, %c1_i32, %c16_i32 : i32
    %7 = vector.broadcast %6 : i32 to vector<4x256xi32>
    %8 = arith.remsi %4, %7 : vector<4x256xi32>
    %c0_i32_4 = arith.constant 0 : i32
    %9 = vector.broadcast %c0_i32_4 : i32 to vector<4x256xi32>
    %10 = arith.cmpi ne, %8, %9 : vector<4x256xi32>
    %c0_i32_5 = arith.constant 0 : i32
    %11 = vector.broadcast %c0_i32_5 : i32 to vector<4x256xi32>
    %12 = arith.cmpi slt, %8, %11 : vector<4x256xi32>
    %c0_i32_6 = arith.constant 0 : i32
    %13 = arith.cmpi slt, %6, %c0_i32_6 : i32
    %14 = vector.broadcast %13 : i1 to vector<4x256xi1>
    %15 = vector.broadcast %14 : vector<4x256xi1> to vector<4x256xi1>
    %16 = arith.xori %12, %15 : vector<4x256xi1>
    %17 = arith.andi %16, %10 : vector<4x256xi1>
    %18 = vector.broadcast %6 : i32 to vector<4x256xi32>
    %19 = arith.addi %8, %18 : vector<4x256xi32>
    %20 = arith.select %17, %19, %8 : vector<4x256xi1>, vector<4x256xi32>
    %cst_7 = arith.constant 0.000000e+00 : f32
    %21 = vector.broadcast %cst_7 : f32 to vector<4x17xf32>
    %22 = vector.extract_strided_slice %1 {offsets = [0, 0], sizes = [4, 239], strides = [1, 1]} : vector<4x256xf32> to vector<4x239xf32>
    %23 = tpu.concatenate %21, %22 in 1 : vector<4x17xf32>, vector<4x239xf32> -> vector<4x256xf32>
    %c-1_i32 = arith.constant -1 : i32
    %24 = vector.broadcast %c-1_i32 : i32 to vector<4x256xi32>
    %25 = arith.addi %20, %24 : vector<4x256xi32>
    %c0_i32_8 = arith.constant 0 : i32
    %26 = vector.broadcast %c0_i32_8 : i32 to vector<4x256xi32>
    %27 = arith.cmpi sge, %25, %26 : vector<4x256xi32>
    %c-1_i32_9 = arith.constant -1 : i32
    %28 = vector.broadcast %c-1_i32_9 : i32 to vector<4x256xi32>
    %29 = arith.addi %20, %28 : vector<4x256xi32>
    %c16_i32_10 = arith.constant 16 : i32
    %30 = vector.broadcast %c16_i32_10 : i32 to vector<4x256xi32>
    %31 = arith.cmpi slt, %29, %30 : vector<4x256xi32>
    %32 = arith.andi %27, %31 : vector<4x256xi1>
    %cst_11 = arith.constant 0.000000e+00 : f32
    %33 = vector.broadcast %cst_11 : f32 to vector<4x256xf32>
    %34 = arith.select %32, %23, %33 : vector<4x256xi1>, vector<4x256xf32>
    %c0_12 = arith.constant 0 : index
    %c0_13 = arith.constant 0 : index
    %35 = vector.load %arg6[%c0_12, %c0_13] : memref<72x256xf32, #tpu.memory_space<vmem>>, vector<4x256xf32>
    tpu.vector_store %arg6[%c0_12, %c0_13], %34 {strides = array<i32>} : memref<72x256xf32, #tpu.memory_space<vmem>>, vector<4x256xf32>,
    %cst_14 = arith.constant 0.000000e+00 : f32
    %36 = vector.broadcast %cst_14 : f32 to vector<4x16xf32>
    %37 = vector.extract_strided_slice %1 {offsets = [0, 0], sizes = [4, 240], strides = [1, 1]} : vector<4x256xf32> to vector<4x240xf32>
    %38 = tpu.concatenate %36, %37 in 1 : vector<4x16xf32>, vector<4x240xf32> -> vector<4x256xf32>
    %c8 = arith.constant 8 : index
    %c0_15 = arith.constant 0 : index
    %39 = vector.load %arg6[%c8, %c0_15] : memref<72x256xf32, #tpu.memory_space<vmem>>, vector<4x256xf32>
    tpu.vector_store %arg6[%c8, %c0_15], %38 {strides = array<i32>} : memref<72x256xf32, #tpu.memory_space<vmem>>, vector<4x256xf32>,
    %cst_16 = arith.constant 0.000000e+00 : f32
    %40 = vector.broadcast %cst_16 : f32 to vector<4x15xf32>
    %41 = vector.extract_strided_slice %1 {offsets = [0, 0], sizes = [4, 241], strides = [1, 1]} : vector<4x256xf32> to vector<4x241xf32>
    %42 = tpu.concatenate %40, %41 in 1 : vector<4x15xf32>, vector<4x241xf32> -> vector<4x256xf32>
    %c1_i32_17 = arith.constant 1 : i32
    %43 = vector.broadcast %c1_i32_17 : i32 to vector<4x256xi32>
    %44 = arith.addi %20, %43 : vector<4x256xi32>
    %c0_i32_18 = arith.constant 0 : i32
    %45 = vector.broadcast %c0_i32_18 : i32 to vector<4x256xi32>
    %46 = arith.cmpi sge, %44, %45 : vector<4x256xi32>
    %c1_i32_19 = arith.constant 1 : i32
    %47 = vector.broadcast %c1_i32_19 : i32 to vector<4x256xi32>
    %48 = arith.addi %20, %47 : vector<4x256xi32>
    %c16_i32_20 = arith.constant 16 : i32
    %49 = vector.broadcast %c16_i32_20 : i32 to vector<4x256xi32>
    %50 = arith.cmpi slt, %48, %49 : vector<4x256xi32>
    %51 = arith.andi %46, %50 : vector<4x256xi1>
    %cst_21 = arith.constant 0.000000e+00 : f32
    %52 = vector.broadcast %cst_21 : f32 to vector<4x256xf32>
    %53 = arith.select %51, %42, %52 : vector<4x256xi1>, vector<4x256xf32>
    %c16 = arith.constant 16 : index
    %c0_22 = arith.constant 0 : index
    %54 = vector.load %arg6[%c16, %c0_22] : memref<72x256xf32, #tpu.memory_space<vmem>>, vector<4x256xf32>
    tpu.vector_store %arg6[%c16, %c0_22], %53 {strides = array<i32>} : memref<72x256xf32, #tpu.memory_space<vmem>>, vector<4x256xf32>,
    %cst_23 = arith.constant 0.000000e+00 : f32
    %55 = vector.broadcast %cst_23 : f32 to vector<4x1xf32>
    %56 = vector.extract_strided_slice %1 {offsets = [0, 0], sizes = [4, 255], strides = [1, 1]} : vector<4x256xf32> to vector<4x255xf32>
    %57 = tpu.concatenate %55, %56 in 1 : vector<4x1xf32>, vector<4x255xf32> -> vector<4x256xf32>
    %c-1_i32_24 = arith.constant -1 : i32
    %58 = vector.broadcast %c-1_i32_24 : i32 to vector<4x256xi32>
    %59 = arith.addi %20, %58 : vector<4x256xi32>
    %c0_i32_25 = arith.constant 0 : i32
    %60 = vector.broadcast %c0_i32_25 : i32 to vector<4x256xi32>
    %61 = arith.cmpi sge, %59, %60 : vector<4x256xi32>
    %c-1_i32_26 = arith.constant -1 : i32
    %62 = vector.broadcast %c-1_i32_26 : i32 to vector<4x256xi32>
    %63 = arith.addi %20, %62 : vector<4x256xi32>
    %c16_i32_27 = arith.constant 16 : i32
    %64 = vector.broadcast %c16_i32_27 : i32 to vector<4x256xi32>
    %65 = arith.cmpi slt, %63, %64 : vector<4x256xi32>
    %66 = arith.andi %61, %65 : vector<4x256xi1>
    %cst_28 = arith.constant 0.000000e+00 : f32
    %67 = vector.broadcast %cst_28 : f32 to vector<4x256xf32>
    %68 = arith.select %66, %57, %67 : vector<4x256xi1>, vector<4x256xf32>
    %c24 = arith.constant 24 : index
    %c0_29 = arith.constant 0 : index
    %69 = vector.load %arg6[%c24, %c0_29] : memref<72x256xf32, #tpu.memory_space<vmem>>, vector<4x256xf32>
    tpu.vector_store %arg6[%c24, %c0_29], %68 {strides = array<i32>} : memref<72x256xf32, #tpu.memory_space<vmem>>, vector<4x256xf32>,
    %c32 = arith.constant 32 : index
    %c0_30 = arith.constant 0 : index
    %70 = vector.load %arg6[%c32, %c0_30] : memref<72x256xf32, #tpu.memory_space<vmem>>, vector<4x256xf32>
    tpu.vector_store %arg6[%c32, %c0_30], %1 {strides = array<i32>} : memref<72x256xf32, #tpu.memory_space<vmem>>, vector<4x256xf32>,
    %cst_31 = arith.constant 0.000000e+00 : f32
    %71 = vector.broadcast %cst_31 : f32 to vector<4x1xf32>
    %72 = vector.extract_strided_slice %1 {offsets = [0, 1], sizes = [4, 255], strides = [1, 1]} : vector<4x256xf32> to vector<4x255xf32>
    %73 = tpu.concatenate %72, %71 in 1 : vector<4x255xf32>, vector<4x1xf32> -> vector<4x256xf32>
    %c1_i32_32 = arith.constant 1 : i32
    %74 = vector.broadcast %c1_i32_32 : i32 to vector<4x256xi32>
    %75 = arith.addi %20, %74 : vector<4x256xi32>
    %c0_i32_33 = arith.constant 0 : i32
    %76 = vector.broadcast %c0_i32_33 : i32 to vector<4x256xi32>
    %77 = arith.cmpi sge, %75, %76 : vector<4x256xi32>
    %c1_i32_34 = arith.constant 1 : i32
    %78 = vector.broadcast %c1_i32_34 : i32 to vector<4x256xi32>
    %79 = arith.addi %20, %78 : vector<4x256xi32>
    %c16_i32_35 = arith.constant 16 : i32
    %80 = vector.broadcast %c16_i32_35 : i32 to vector<4x256xi32>
    %81 = arith.cmpi slt, %79, %80 : vector<4x256xi32>
    %82 = arith.andi %77, %81 : vector<4x256xi1>
    %cst_36 = arith.constant 0.000000e+00 : f32
    %83 = vector.broadcast %cst_36 : f32 to vector<4x256xf32>
    %84 = arith.select %82, %73, %83 : vector<4x256xi1>, vector<4x256xf32>
    %c40 = arith.constant 40 : index
    %c0_37 = arith.constant 0 : index
    %85 = vector.load %arg6[%c40, %c0_37] : memref<72x256xf32, #tpu.memory_space<vmem>>, vector<4x256xf32>
    tpu.vector_store %arg6[%c40, %c0_37], %84 {strides = array<i32>} : memref<72x256xf32, #tpu.memory_space<vmem>>, vector<4x256xf32>,
    %cst_38 = arith.constant 0.000000e+00 : f32
    %86 = vector.broadcast %cst_38 : f32 to vector<4x15xf32>
    %87 = vector.extract_strided_slice %1 {offsets = [0, 15], sizes = [4, 241], strides = [1, 1]} : vector<4x256xf32> to vector<4x241xf32>
    %88 = tpu.concatenate %87, %86 in 1 : vector<4x241xf32>, vector<4x15xf32> -> vector<4x256xf32>
    %c-1_i32_39 = arith.constant -1 : i32
    %89 = vector.broadcast %c-1_i32_39 : i32 to vector<4x256xi32>
    %90 = arith.addi %20, %89 : vector<4x256xi32>
    %c0_i32_40 = arith.constant 0 : i32
    %91 = vector.broadcast %c0_i32_40 : i32 to vector<4x256xi32>
    %92 = arith.cmpi sge, %90, %91 : vector<4x256xi32>
    %c-1_i32_41 = arith.constant -1 : i32
    %93 = vector.broadcast %c-1_i32_41 : i32 to vector<4x256xi32>
    %94 = arith.addi %20, %93 : vector<4x256xi32>
    %c16_i32_42 = arith.constant 16 : i32
    %95 = vector.broadcast %c16_i32_42 : i32 to vector<4x256xi32>
    %96 = arith.cmpi slt, %94, %95 : vector<4x256xi32>
    %97 = arith.andi %92, %96 : vector<4x256xi1>
    %cst_43 = arith.constant 0.000000e+00 : f32
    %98 = vector.broadcast %cst_43 : f32 to vector<4x256xf32>
    %99 = arith.select %97, %88, %98 : vector<4x256xi1>, vector<4x256xf32>
    %c48 = arith.constant 48 : index
    %c0_44 = arith.constant 0 : index
    %100 = vector.load %arg6[%c48, %c0_44] : memref<72x256xf32, #tpu.memory_space<vmem>>, vector<4x256xf32>
    tpu.vector_store %arg6[%c48, %c0_44], %99 {strides = array<i32>} : memref<72x256xf32, #tpu.memory_space<vmem>>, vector<4x256xf32>,
    %cst_45 = arith.constant 0.000000e+00 : f32
    %101 = vector.broadcast %cst_45 : f32 to vector<4x16xf32>
    %102 = vector.extract_strided_slice %1 {offsets = [0, 16], sizes = [4, 240], strides = [1, 1]} : vector<4x256xf32> to vector<4x240xf32>
    %103 = tpu.concatenate %102, %101 in 1 : vector<4x240xf32>, vector<4x16xf32> -> vector<4x256xf32>
    %c56 = arith.constant 56 : index
    %c0_46 = arith.constant 0 : index
    %104 = vector.load %arg6[%c56, %c0_46] : memref<72x256xf32, #tpu.memory_space<vmem>>, vector<4x256xf32>
    tpu.vector_store %arg6[%c56, %c0_46], %103 {strides = array<i32>} : memref<72x256xf32, #tpu.memory_space<vmem>>, vector<4x256xf32>,
    %cst_47 = arith.constant 0.000000e+00 : f32
    %105 = vector.broadcast %cst_47 : f32 to vector<4x17xf32>
    %106 = vector.extract_strided_slice %1 {offsets = [0, 17], sizes = [4, 239], strides = [1, 1]} : vector<4x256xf32> to vector<4x239xf32>
    %107 = tpu.concatenate %106, %105 in 1 : vector<4x239xf32>, vector<4x17xf32> -> vector<4x256xf32>
    %c1_i32_48 = arith.constant 1 : i32
    %108 = vector.broadcast %c1_i32_48 : i32 to vector<4x256xi32>
    %109 = arith.addi %20, %108 : vector<4x256xi32>
    %c0_i32_49 = arith.constant 0 : i32
    %110 = vector.broadcast %c0_i32_49 : i32 to vector<4x256xi32>
    %111 = arith.cmpi sge, %109, %110 : vector<4x256xi32>
    %c1_i32_50 = arith.constant 1 : i32
    %112 = vector.broadcast %c1_i32_50 : i32 to vector<4x256xi32>
    %113 = arith.addi %20, %112 : vector<4x256xi32>
    %c16_i32_51 = arith.constant 16 : i32
    %114 = vector.broadcast %c16_i32_51 : i32 to vector<4x256xi32>
    %115 = arith.cmpi slt, %113, %114 : vector<4x256xi32>
    %116 = arith.andi %111, %115 : vector<4x256xi1>
    %cst_52 = arith.constant 0.000000e+00 : f32
    %117 = vector.broadcast %cst_52 : f32 to vector<4x256xf32>
    %118 = arith.select %116, %107, %117 : vector<4x256xi1>, vector<4x256xf32>
    %c64 = arith.constant 64 : index
    %c0_53 = arith.constant 0 : index
    %119 = vector.load %arg6[%c64, %c0_53] : memref<72x256xf32, #tpu.memory_space<vmem>>, vector<4x256xf32>
    tpu.vector_store %arg6[%c64, %c0_53], %118 {strides = array<i32>} : memref<72x256xf32, #tpu.memory_space<vmem>>, vector<4x256xf32>,
    %c0_54 = arith.constant 0 : index
    %c0_55 = arith.constant 0 : index
    %120 = vector.load %arg2[%c0_54, %c0_55] : memref<8x72xf32, #tpu.memory_space<vmem>>, vector<8x72xf32>
    %c0_56 = arith.constant 0 : index
    %c0_57 = arith.constant 0 : index
    %121 = vector.load %arg6[%c0_56, %c0_57] : memref<72x256xf32, #tpu.memory_space<vmem>>, vector<72x256xf32>
    %cst_58 = arith.constant dense<0.000000e+00> : vector<8x256xf32>
    %122 = tpu.matmul %120, %121, %cst_58 {dimension_numbers = #tpu.dot_dimension_numbers<[1], [0], [0], [1], [0, 0, 1, 1], [], []>} : vector<8x72xf32>, vector<72x256xf32>, vector<8x256xf32> -> vector<8x256xf32>
    %c0_59 = arith.constant 0 : index
    %c0_60 = arith.constant 0 : index
    %123 = vector.load %arg3[%c0_59, %c0_60] : memref<8x1xf32, #tpu.memory_space<vmem>>, vector<8x1xf32>
    %124 = vector.broadcast %123 : vector<8x1xf32> to vector<8x256xf32>
    %125 = arith.mulf %122, %124 : vector<8x256xf32>
    %c0_61 = arith.constant 0 : index
    %c0_62 = arith.constant 0 : index
    %126 = vector.load %arg4[%c0_61, %c0_62] : memref<8x1xf32, #tpu.memory_space<vmem>>, vector<8x1xf32>
    %127 = vector.broadcast %126 : vector<8x1xf32> to vector<8x256xf32>
    %128 = arith.addf %125, %127 : vector<8x256xf32>
    %cst_63 = arith.constant 0.000000e+00 : f32
    %cst_64 = arith.constant 6.000000e+00 : f32
    %129 = vector.broadcast %cst_63 : f32 to vector<8x256xf32>
    %130 = arith.maximumf %129, %128 : vector<8x256xf32>
    %131 = vector.broadcast %cst_64 : f32 to vector<8x256xf32>
    %132 = arith.minimumf %131, %130 : vector<8x256xf32>
    %c0_65 = arith.constant 0 : index
    %c0_66 = arith.constant 0 : index
    %c0_67 = arith.constant 0 : index
    %133 = vector.load %arg5[%c0_65, %c0_66, %c0_67] : memref<1x8x256xf32, #tpu.memory_space<vmem>>, vector<1x8x256xf32>
    %134 = vector.shape_cast %133 : vector<1x8x256xf32> to vector<8x256xf32>
    %135 = vector.shape_cast %132 : vector<8x256xf32> to vector<1x8x256xf32>
    tpu.vector_store %arg5[%c0_65, %c0_66, %c0_67], %135 {strides = array<i32>} : memref<1x8x256xf32, #tpu.memory_space<vmem>>, vector<1x8x256xf32>,
    return
  }
  func.func @transform_0(%arg0: i32) -> (i32, i32, i32) {
    %c0_i32 = arith.constant 0 : i32
    %c0_i32_0 = arith.constant 0 : i32
    %c0_i32_1 = arith.constant 0 : i32
    return %arg0, %c0_i32, %c0_i32_0 : i32, i32, i32
  }
  func.func @transform_1(%arg0: i32) -> (i32, i32) {
    %c0_i32 = arith.constant 0 : i32
    %c0_i32_0 = arith.constant 0 : i32
    %c0_i32_1 = arith.constant 0 : i32
    return %c0_i32, %c0_i32_0 : i32, i32
  }
  func.func @transform_2(%arg0: i32) -> (i32, i32) {
    %c0_i32 = arith.constant 0 : i32
    %c0_i32_0 = arith.constant 0 : i32
    %c0_i32_1 = arith.constant 0 : i32
    return %c0_i32, %c0_i32_0 : i32, i32
  }
  func.func @transform_3(%arg0: i32) -> (i32, i32) {
    %c0_i32 = arith.constant 0 : i32
    %c0_i32_0 = arith.constant 0 : i32
    %c0_i32_1 = arith.constant 0 : i32
    return %c0_i32, %c0_i32_0 : i32, i32
  }
  func.func @transform_4(%arg0: i32) -> (i32, i32, i32) {
    %c0_i32 = arith.constant 0 : i32
    %c0_i32_0 = arith.constant 0 : i32
    %c0_i32_1 = arith.constant 0 : i32
    return %arg0, %c0_i32, %c0_i32_0 : i32, i32, i32
  }
}

</mosaic_0001>

<llo_original>
// kernel: tpu_custom_call.1
$region0: #{tpu_custom_call.1}
  #allocation0 [shape = 'u32[]', space=smem, size = 0x4, offset = 0x4, fixed_abs, tag = 'smem constant byte address 0x4 - core index']
  #allocation1 [shape = 'u32[144,128]{1,0:T(1,128)}', space=vmem, size = 0x12000, scoped, tag = 'internal scratch']
  #allocation2 [shape = 'f32[72,256]{1,0:T(8,128)}', space=vmem, size = 0x12000, scoped, tag = 'scratch operand']
  %s0 = inlined_call_operand.vmem [shape: f32[2,4,256], index: 0, kind: input, shape index: {}]
  %s1 = inlined_call_operand.hbm [shape: f32[8,72], index: 1, kind: input, shape index: {}]
  %s2 = inlined_call_operand.vmem [shape: f32[8,1], index: 2, kind: input, shape index: {}]
  %s3 = inlined_call_operand.vmem [shape: f32[8,1], index: 3, kind: input, shape index: {}]
  %s4 = inlined_call_operand.hbm [shape: f32[2,8,256], index: 4, kind: output, shape index: {}]
  %s5 = sld [smem:[#allocation0]]
  $region53: #{tpu_custom_call.1} parent=0
    _
  %s7 = ssub.s32 1, %s5
  %s8 = scalar_select 0, %s7, %s5
  $region1: #{tpu_custom_call.1} parent=0
    #allocation3 [shape = 'u8[4096]{0}', space=vmem, size = 0x1000, scoped, tag = 'input window, operand 1, single buffered']
    #allocation4 [shape = 's32[2]{0}', space=sflag, size = 0x8, scoped, tag = 'scoped memory for tpu_custom_call.1']
    #allocation5 [shape = 's32[2]{0}', space=sflag, size = 0x8, scoped, tag = 'scoped memory for tpu_custom_call.1']
    #allocation6 [shape = 'u8[16384]{0}', space=vmem, size = 0x4000, scoped, tag = 'output window, operand 0']
    %9 = vsyncpa [#allocation4], 0
    %10 = vsyncpa [#allocation5], 0
    %s11 = scalar_lea.sflag [#allocation5], 1
    %12 = vsyncpa %s11, 0
    loop: start=0, step=1, limit=4
    $region2: #{tpu_custom_call.1} parent=1 // loop_pre_header
      _
    $region3: #{tpu_custom_call.1} parent=1 // loop_header
      %s14 = sphi 0, %s18
      %p15 = scmp.ge.s32.totalorder %s14, 4
      %s24 = sphi 0, %s26
      %s27 = sphi 0, %s24
      %s28 = sphi 0, %s27
      %s44 = sphi 0, %s28
      %s48 = sphi 0, %s48
      %s50 = sphi 0, %s48
      %s51 = sphi 0, %s50
      %s65 = sphi 0, %s51
      %s69 = sphi 0, %s69
      %s71 = sphi 0, %s69
      %s72 = sphi 0, %s71
      %s86 = sphi 0, %s72
      %s90 = sphi 0, %s90
      %s92 = sphi 0, %s90
      %s93 = sphi 0, %s92
      %s107 = sphi 0, %s93
      %s113 = sphi 0, %s115
      %s116 = sphi 0, %s113
      %s117 = sphi 0, %s116
      %s133 = sphi 0, %s117
    $region4: #{tpu_custom_call.1} parent=1 // loop_header_branch
      %17 = sbr.rel (%p15) target = $region8
    $region5: #{tpu_custom_call.1} parent=1 // loop_body
      %s19 = ssub.s32 %s14, 1
      %s20 = ssub.s32 %s14, 2
      %s21 = sadd.s32 %s14, 1
      %s22 = ssub.s32 %s14, %s21
      %p23 = scmp.eq.s32.totalorder %s22, 0
      %s25 = sadd.s32 %s24, 1
      %s26 = scalar_select %p23, %s24, %s25
      %p29 = pneg %p23
      %p30 = scmp.eq.s32.totalorder %s14, 1
      %p31 = por %p29, %p30
      %p32 = scmp.ne.s32.totalorder %s24, %s27
      %p33 = scmp.eq.s32.totalorder %s14, 0
      %p34 = por %p32, %p33
      %p35 = scmp.ne.s32.totalorder %s24, %s27
      %p36 = scmp.eq.s32.totalorder %s19, 1
      %p37 = por %p35, %p36
      %p38 = scmp.ne.s32.totalorder %s27, %s28
      %p39 = scmp.eq.s32.totalorder %s19, 0
      %p40 = por %p38, %p39
      %p41 = scmp.ne.s32.totalorder %s27, %s28
      %p42 = scmp.eq.s32.totalorder %s20, 1
      %p43 = por %p41, %p42
      %p45 = scmp.ne.s32.totalorder %s28, %s44
      %p46 = scmp.eq.s32.totalorder %s20, 0
      %p47 = por %p45, %p46
      %s49 = sadd.s32 %s48, 1
      %p52 = scmp.eq.s32.totalorder %s14, 1
      %p53 = scmp.ne.s32.totalorder %s48, %s50
      %p54 = scmp.eq.s32.totalorder %s14, 0
      %p55 = por %p53, %p54
      %p56 = scmp.ne.s32.totalorder %s48, %s50
      %p57 = scmp.eq.s32.totalorder %s19, 1
      %p58 = por %p56, %p57
      %p59 = scmp.ne.s32.totalorder %s50, %s51
      %p60 = scmp.eq.s32.totalorder %s19, 0
      %p61 = por %p59, %p60
      %p62 = scmp.ne.s32.totalorder %s50, %s51
      %p63 = scmp.eq.s32.totalorder %s20, 1
      %p64 = por %p62, %p63
      %p66 = scmp.ne.s32.totalorder %s51, %s65
      %p67 = scmp.eq.s32.totalorder %s20, 0
      %p68 = por %p66, %p67
      %s70 = sadd.s32 %s69, 1
      %p73 = scmp.eq.s32.totalorder %s14, 1
      %p74 = scmp.ne.s32.totalorder %s69, %s71
      %p75 = scmp.eq.s32.totalorder %s14, 0
      %p76 = por %p74, %p75
      %p77 = scmp.ne.s32.totalorder %s69, %s71
      %p78 = scmp.eq.s32.totalorder %s19, 1
      %p79 = por %p77, %p78
      %p80 = scmp.ne.s32.totalorder %s71, %s72
      %p81 = scmp.eq.s32.totalorder %s19, 0
      %p82 = por %p80, %p81
      %p83 = scmp.ne.s32.totalorder %s71, %s72
      %p84 = scmp.eq.s32.totalorder %s20, 1
      %p85 = por %p83, %p84
      %p87 = scmp.ne.s32.totalorder %s72, %s86
      %p88 = scmp.eq.s32.totalorder %s20, 0
      %p89 = por %p87, %p88
      %s91 = sadd.s32 %s90, 1
      %p94 = scmp.eq.s32.totalorder %s14, 1
      %p95 = scmp.ne.s32.totalorder %s90, %s92
      %p96 = scmp.eq.s32.totalorder %s14, 0
      %p97 = por %p95, %p96
      %p98 = scmp.ne.s32.totalorder %s90, %s92
      %p99 = scmp.eq.s32.totalorder %s19, 1
      %p100 = por %p98, %p99
      %p101 = scmp.ne.s32.totalorder %s92, %s93
      %p102 = scmp.eq.s32.totalorder %s19, 0
      %p103 = por %p101, %p102
      %p104 = scmp.ne.s32.totalorder %s92, %s93
      %p105 = scmp.eq.s32.totalorder %s20, 1
      %p106 = por %p104, %p105
      %p108 = scmp.ne.s32.totalorder %s93, %s107
      %p109 = scmp.eq.s32.totalorder %s20, 0
      %p110 = por %p108, %p109
      %s111 = ssub.s32 %s14, %s21
      %p112 = scmp.eq.s32.totalorder %s111, 0
      %s114 = sadd.s32 %s113, 1
      %s115 = scalar_select %p112, %s113, %s114
      %p118 = pneg %p112
      %p119 = scmp.eq.s32.totalorder %s14, 1
      %p120 = por %p118, %p119
      %p121 = scmp.ne.s32.totalorder %s113, %s116
      %p122 = scmp.eq.s32.totalorder %s14, 0
      %p123 = por %p121, %p122
      %p124 = scmp.ne.s32.totalorder %s113, %s116
      %p125 = scmp.eq.s32.totalorder %s19, 1
      %p126 = por %p124, %p125
      %p127 = scmp.ne.s32.totalorder %s116, %s117
      %p128 = scmp.eq.s32.totalorder %s19, 0
      %p129 = por %p127, %p128
      %p130 = scmp.ne.s32.totalorder %s116, %s117
      %p131 = scmp.eq.s32.totalorder %s20, 1
      %p132 = por %p130, %p131
      %p134 = scmp.ne.s32.totalorder %s117, %s133
      %p135 = scmp.eq.s32.totalorder %s20, 0
      %p136 = por %p134, %p135
      %p137 = scmp.le.s32.totalorder 1, %s14
      %p138 = scmp.lt.s32.totalorder %s14, 3
      %p139 = pnand %p137, %p138
      %p140 = pneg %p139
      // Predicated region
      $region9: #{tpu_custom_call.1} parent=5 // pred_check
        _
      $region10: #{tpu_custom_call.1} parent=5 // pred_check_branch
        %142 = sbr.rel (%p139) target = $region12
      $region11: #{tpu_custom_call.1} parent=5 // pred_region
        %s143 = ssub.s32 %s14, 1
        // Predicated region
        $region13: #{tpu_custom_call.1} parent=11 // pred_check
          %p144 = pneg %p61
        $region14: #{tpu_custom_call.1} parent=11 // pred_check_branch
          %146 = sbr.rel (%p144) target = $region16
        $region15: #{tpu_custom_call.1} parent=11 // pred_region
          %s148 = ssub.s32 128, 128
          %149 = vsyncadd [#allocation4], %s148
          %s151 = sshll.u32 [#allocation3], 4
          %s152 = int_to_ptr.vmem [resolvable:$true] %s151
          %154 = dma.hbm_to_vmem [thread:$0]  %s1, 128, %s152, [#allocation4]
        $region16: #{tpu_custom_call.1} parent=11 // pred_fallthru
          _
        // Predicated region
        $region17: #{tpu_custom_call.1} parent=11 // pred_check
          %p155 = pneg %p82
        $region18: #{tpu_custom_call.1} parent=11 // pred_check_branch
          %157 = sbr.rel (%p155) target = $region20
        $region19: #{tpu_custom_call.1} parent=11 // pred_region
          _
        $region20: #{tpu_custom_call.1} parent=11 // pred_fallthru
          _
        // Predicated region
        $region21: #{tpu_custom_call.1} parent=11 // pred_check
          %p158 = pneg %p103
        $region22: #{tpu_custom_call.1} parent=11 // pred_check_branch
          %160 = sbr.rel (%p158) target = $region24
        $region23: #{tpu_custom_call.1} parent=11 // pred_region
          _
        $region24: #{tpu_custom_call.1} parent=11 // pred_fallthru
          _
      $region12: #{tpu_custom_call.1} parent=5 // pred_fallthru
        _
      %p161 = scmp.lt.s32.totalorder %s14, 2
      // Predicated region
      $region25: #{tpu_custom_call.1} parent=5 // pred_check
        %p162 = pneg %p161
      $region26: #{tpu_custom_call.1} parent=5 // pred_check_branch
        %164 = sbr.rel (%p162) target = $region28
      $region27: #{tpu_custom_call.1} parent=5 // pred_region
        // Predicated region
        $region29: #{tpu_custom_call.1} parent=27 // pred_check
          %p165 = pneg %p34
        $region30: #{tpu_custom_call.1} parent=27 // pred_check_branch
          %167 = sbr.rel (%p165) target = $region32
        $region31: #{tpu_custom_call.1} parent=27 // pred_region
          %p168 = scmp.lt.s32.totalorder %s14, 1
          %s169 = scalar_select %p168, %s14, 1
          %s170 = smul.addr %s169, 2
          %s171 = smul.addr %s170, 4
          %s172 = scalar_lea.vmem %s0, %s171
        $region32: #{tpu_custom_call.1} parent=27 // pred_fallthru
          _
      $region28: #{tpu_custom_call.1} parent=5 // pred_fallthru
        _
      %p173 = scmp.le.s32.totalorder 1, %s14
      %p174 = scmp.lt.s32.totalorder %s14, 3
      %p175 = pnand %p173, %p174
      %p176 = pneg %p175
      // Predicated region
      $region33: #{tpu_custom_call.1} parent=5 // pred_check
        _
      $region34: #{tpu_custom_call.1} parent=5 // pred_check_branch
        %178 = sbr.rel (%p175) target = $region36
      $region35: #{tpu_custom_call.1} parent=5 // pred_region
        %s179 = ssub.s32 %s14, 1
        // Predicated region
        $region37: #{tpu_custom_call.1} parent=35 // pred_check
          %p180 = pneg %p61
        $region38: #{tpu_custom_call.1} parent=35 // pred_check_branch
          %182 = sbr.rel (%p180) target = $region40
        $region39: #{tpu_custom_call.1} parent=35 // pred_region
          %183 = dma.done [#allocation4], 128
        $region40: #{tpu_custom_call.1} parent=35 // pred_fallthru
          _
        %p184 = scmp.lt.s32.totalorder %s19, 1
        %s185 = scalar_select %p184, %s19, 1
        %s186 = smul.addr %s185, 2
        %s187 = smul.addr %s186, 4
        %s188 = scalar_lea.vmem %s0, %s187
        %p189 = pneg %p40
        %p190 = pneg %p37
        %p191 = pneg %p61
        %p192 = pneg %p58
        %p193 = pneg %p82
        %p194 = pneg %p79
        %p195 = pneg %p103
        %p196 = pneg %p100
        %p197 = pneg %p129
        %p198 = pneg %p126
        %s199 = sand.u32 %s116, 1
        %s200 = scalar_lea.sflag [#allocation5], %s199
        %s201 = sand.u32 %s116, 1
        %s202 = smul.addr %s201, 16
        %s203 = scalar_lea.vmem [#allocation6], %s202
        %p204 = scmp.lt.s32.totalorder %s19, 1
        %s205 = scalar_select %p204, %s19, 1
        %s206 = smul.addr %s205, 2
        %s207 = smul.addr %s206, 4
        %s208 = scalar_lea.vmem %s0, %s207
        %v209 = vld [vmem:[%s208] sm:$0xff]
        %210 = vst [vmem:[#allocation2] sm:$0xff] 0.0
        %211 = vst [vmem:[#allocation2 + $0x8] sm:$0xff] 0.0
        %212 = vst [vmem:[#allocation2 + $0x10] sm:$0xff] 0.0
        %213 = vst [vmem:[#allocation2 + $0x18] sm:$0xff] 0.0
        %214 = vst [vmem:[#allocation2 + $0x20] sm:$0xff] 0.0
        %215 = vst [vmem:[#allocation2 + $0x28] sm:$0xff] 0.0
        %216 = vst [vmem:[#allocation2 + $0x30] sm:$0xff] 0.0
        %217 = vst [vmem:[#allocation2 + $0x38] sm:$0xff] 0.0
        %218 = vst [vmem:[#allocation2 + $0x40] sm:$0xff] 0.0
        %219 = vst [vmem:[#allocation2 + $0x48] sm:$0xff] 0.0
        %220 = vst [vmem:[#allocation2 + $0x50] sm:$0xff] 0.0
        %221 = vst [vmem:[#allocation2 + $0x58] sm:$0xff] 0.0
        %222 = vst [vmem:[#allocation2 + $0x60] sm:$0xff] 0.0
        %223 = vst [vmem:[#allocation2 + $0x68] sm:$0xff] 0.0
        %224 = vst [vmem:[#allocation2 + $0x70] sm:$0xff] 0.0
        %225 = vst [vmem:[#allocation2 + $0x78] sm:$0xff] 0.0
        %226 = vst [vmem:[#allocation2 + $0x80] sm:$0xff] 0.0
        %227 = vst [vmem:[#allocation2 + $0x88] sm:$0xff] 0.0
        %v228 = vlaneseq
        %v229 = vand.u32 %v228, 127
        %v230 = vadd.s32 %v229, 128
        %vm231 = vcmp.lt.s32.totalorder %v229, 0
        %v232 = vsub.s32 0, %v229
        %v233 = vsel %vm231, %v232, %v229
        %v234 = vshrl.u32 %v233, 4
        %v235 = vand.u32 %v233, 15
        %v236 = vsub.s32 0, %v235
        %v237 = vsel %vm231, %v236, %v235
        %vm238 = vcmp.lt.s32.totalorder %v230, 0
        %v239 = vsub.s32 0, %v230
        %v240 = vsel %vm238, %v239, %v230
        %v241 = vshrl.u32 %v240, 4
        %v242 = vand.u32 %v240, 15
        %v243 = vsub.s32 0, %v242
        %v244 = vsel %vm238, %v243, %v242
        %vm245 = vcmp.ne.s32.totalorder %v237, 0
        %vm246 = vcmp.ne.s32.totalorder %v244, 0
        %vm247 = vcmp.lt.s32.totalorder %v237, 0
        %vm248 = vcmp.lt.s32.totalorder %v244, 0
        %vm249 = vmand %vm247, %vm245
        %vm250 = vmand %vm248, %vm246
        %v251 = vadd.s32 %v237, 16
        %v252 = vadd.s32 %v244, 16
        %v253 = vsel %vm249, %v251, %v237
        %v254 = vsel %vm250, %v252, %v244
        %v256 = vcombine.high %v209, %v209
        %257 = vrot.lane.b32.xlu0 %v209, 17
        %v258 = vpop.permute.xlu0 %257
        %259 = vrot.lane.b32.xlu0 %v256, 17
        %v260 = vpop.permute.xlu0 %259
        %vm261 = vcmask 138240
        %v262 = vsel %vm261, %v258, %v260
        %v265 = vsel %vm261, 0.0, %v258
        %v266 = vadd.s32 %v253, 4294967295
        %v267 = vadd.s32 %v254, 4294967295
        %vm268 = vcmp.ge.s32.totalorder %v266, 0
        %vm269 = vcmp.ge.s32.totalorder %v267, 0
        %vm270 = vcmp.lt.s32.totalorder %v266, 16
        %vm271 = vcmp.lt.s32.totalorder %v267, 16
        %vm272 = vmand %vm268, %vm270
        %vm273 = vmand %vm269, %vm271
        %v274 = vsel %vm272, %v265, 0.0
        %v275 = vsel %vm273, %v262, 0.0
        %276 = vst [vmem:[#allocation2] sm:$0xf] %v274
        %277 = vst [vmem:[#allocation2 + $0x8] sm:$0xf] %v275
        %278 = vrot.lane.b32.xlu0 %v209, 16
        %v279 = vpop.permute.xlu0 %278
        %280 = vrot.lane.b32.xlu0 %v256, 16
        %v281 = vpop.permute.xlu0 %280
        %vm282 = vcmask 130048
        %v283 = vsel %vm282, %v279, %v281
        %v286 = vsel %vm282, 0.0, %v279
        %287 = vst [vmem:[#allocation2 + $0x10] sm:$0xf] %v286
        %288 = vst [vmem:[#allocation2 + $0x18] sm:$0xf] %v283
        %289 = vrot.lane.b32.xlu0 %v209, 15
        %v290 = vpop.permute.xlu0 %289
        %291 = vrot.lane.b32.xlu0 %v256, 15
        %v292 = vpop.permute.xlu0 %291
        %vm293 = vcmask 121856
        %v294 = vsel %vm293, %v290, %v292
        %v297 = vsel %vm293, 0.0, %v290
        %v298 = vadd.s32 %v253, 1
        %v299 = vadd.s32 %v254, 1
        %vm300 = vcmp.ge.s32.totalorder %v298, 0
        %vm301 = vcmp.ge.s32.totalorder %v299, 0
        %vm302 = vcmp.lt.s32.totalorder %v298, 16
        %vm303 = vcmp.lt.s32.totalorder %v299, 16
        %vm304 = vmand %vm300, %vm302
        %vm305 = vmand %vm301, %vm303
        %v306 = vsel %vm304, %v297, 0.0
        %v307 = vsel %vm305, %v294, 0.0
        %308 = vst [vmem:[#allocation2 + $0x20] sm:$0xf] %v306
        %309 = vst [vmem:[#allocation2 + $0x28] sm:$0xf] %v307
        %310 = vrot.lane.b32.xlu0 %v209, 1
        %v311 = vpop.permute.xlu0 %310
        %312 = vrot.lane.b32.xlu0 %v256, 1
        %v313 = vpop.permute.xlu0 %312
        %vm314 = vcmask 7168
        %v315 = vsel %vm314, %v311, %v313
        %v318 = vsel %vm314, 0.0, %v311
        %v319 = vsel %vm272, %v318, 0.0
        %v320 = vsel %vm273, %v315, 0.0
        %321 = vst [vmem:[#allocation2 + $0x30] sm:$0xf] %v319
        %322 = vst [vmem:[#allocation2 + $0x38] sm:$0xf] %v320
        %324 = vst [vmem:[#allocation2 + $0x40] sm:$0xf] %v209
        %325 = vst [vmem:[#allocation2 + $0x48] sm:$0xf] %v256
        %326 = vrot.lane.b32.xlu0 %v209, 127
        %v327 = vpop.permute.xlu0 %326
        %328 = vrot.lane.b32.xlu0 %v256, 127
        %v329 = vpop.permute.xlu0 %328
        %vm330 = vcmask 1039360
        %v331 = vsel %vm330, %v327, %v329
        %v334 = vsel %vm330, %v329, 0.0
        %v335 = vsel %vm304, %v331, 0.0
        %v336 = vsel %vm305, %v334, 0.0
        %337 = vst [vmem:[#allocation2 + $0x50] sm:$0xf] %v335
        %338 = vst [vmem:[#allocation2 + $0x58] sm:$0xf] %v336
        %339 = vrot.lane.b32.xlu0 %v209, 113
        %v340 = vpop.permute.xlu0 %339
        %341 = vrot.lane.b32.xlu0 %v256, 113
        %v342 = vpop.permute.xlu0 %341
        %vm343 = vcmask 924672
        %v344 = vsel %vm343, %v340, %v342
        %v347 = vsel %vm343, %v342, 0.0
        %v348 = vsel %vm272, %v344, 0.0
        %v349 = vsel %vm273, %v347, 0.0
        %350 = vst [vmem:[#allocation2 + $0x60] sm:$0xf] %v348
        %351 = vst [vmem:[#allocation2 + $0x68] sm:$0xf] %v349
        %352 = vrot.lane.b32.xlu0 %v209, 112
        %v353 = vpop.permute.xlu0 %352
        %354 = vrot.lane.b32.xlu0 %v256, 112
        %v355 = vpop.permute.xlu0 %354
        %vm356 = vcmask 916480
        %v357 = vsel %vm356, %v353, %v355
        %v360 = vsel %vm356, %v355, 0.0
        %361 = vst [vmem:[#allocation2 + $0x70] sm:$0xf] %v357
        %362 = vst [vmem:[#allocation2 + $0x78] sm:$0xf] %v360
        %363 = vrot.lane.b32.xlu0 %v209, 111
        %v364 = vpop.permute.xlu0 %363
        %365 = vrot.lane.b32.xlu0 %v256, 111
        %v366 = vpop.permute.xlu0 %365
        %vm367 = vcmask 908288
        %v368 = vsel %vm367, %v364, %v366
        %v371 = vsel %vm367, %v366, 0.0
        %v372 = vsel %vm304, %v368, 0.0
        %v373 = vsel %vm305, %v371, 0.0
        %374 = vst [vmem:[#allocation2 + $0x80] sm:$0xf] %v372
        %375 = vst [vmem:[#allocation2 + $0x88] sm:$0xf] %v373
        %v376 = vld [vmem:[#allocation3] sm:$0xff]
        %v377 = vld [vmem:[#allocation2] sm:$0xff]
        %v378 = vld [vmem:[#allocation2 + $0x8] sm:$0xff]
        %v379 = vld [vmem:[#allocation2 + $0x10] sm:$0xff]
        %v380 = vld [vmem:[#allocation2 + $0x18] sm:$0xff]
        %v381 = vld [vmem:[#allocation2 + $0x20] sm:$0xff]
        %v382 = vld [vmem:[#allocation2 + $0x28] sm:$0xff]
        %v383 = vld [vmem:[#allocation2 + $0x30] sm:$0xff]
        %v384 = vld [vmem:[#allocation2 + $0x38] sm:$0xff]
        %v385 = vld [vmem:[#allocation2 + $0x40] sm:$0xff]
        %v386 = vld [vmem:[#allocation2 + $0x48] sm:$0xff]
        %v387 = vld [vmem:[#allocation2 + $0x50] sm:$0xff]
        %v388 = vld [vmem:[#allocation2 + $0x58] sm:$0xff]
        %v389 = vld [vmem:[#allocation2 + $0x60] sm:$0xff]
        %v390 = vld [vmem:[#allocation2 + $0x68] sm:$0xff]
        %v391 = vld [vmem:[#allocation2 + $0x70] sm:$0xff]
        %v392 = vld [vmem:[#allocation2 + $0x78] sm:$0xff]
        %v393 = vld [vmem:[#allocation2 + $0x80] sm:$0xff]
        %v394 = vld [vmem:[#allocation2 + $0x88] sm:$0xff]
        %vm395 = vcmask 588800
        %v397 = vsel %vm395, %v376, 0
        %399 = vmatprep.subr.mxu0 %v378
        %400 = vmatpush1.msra.mxu0 %v377
        %401 = vmatprep.subr.mxu0 %v380
        %402 = vmatpush1.msra.mxu0 %v379
        %403 = vmatprep.subr.mxu0 %v382
        %404 = vmatpush1.msra.mxu0 %v381
        %405 = vmatprep.subr.mxu0 %v384
        %406 = vmatpush1.msra.mxu0 %v383
        %407 = vmatprep.subr.mxu0 %v386
        %408 = vmatpush1.msra.mxu0 %v385
        %409 = vmatprep.subr.mxu0 %v388
        %410 = vmatpush1.msra.mxu0 %v387
        %411 = vmatprep.subr.mxu0 %v390
        %412 = vmatpush1.msra.mxu0 %v389
        %413 = vmatprep.subr.mxu0 %v392
        %414 = vmatpush1.msra.mxu0 %v391
        %415 = vmatprep.subr.mxu0 %v394
        %416 = vmatpush1.msra.mxu0 %v393
        %417 = vmatprep.subr.mxu0 0.0
        %418 = vmatpush1.msra.mxu0 0.0
        %419 = vmatprep.subr.mxu0 0.0
        %420 = vmatpush1.msra.mxu0 0.0
        %421 = vmatprep.subr.mxu0 0.0
        %422 = vmatpush1.msra.mxu0 0.0
        %423 = vmatprep.subr.mxu0 0.0
        %424 = vmatpush1.msra.mxu0 0.0
        %425 = vmatprep.subr.mxu0 0.0
        %426 = vmatpush1.msra.mxu0 0.0
        %427 = vmatprep.subr.mxu0 0.0
        %428 = vmatpush1.msra.mxu0 0.0
        %429 = vmatprep.subr.mxu0 0.0
        %430 = vmatpush1.msra.mxu0 0.0
        %431 = vmatprep.subr.mxu0 0.0
        %432 = vmatpush1.msra.mxu0 0.0
        %433 = vmatprep.subr.mxu0 0.0
        %434 = vmatpush1.msra.mxu0 0.0
        %435 = vmatprep.subr.mxu0 0.0
        %436 = vmatpush1.msra.mxu0 0.0
        %437 = vmatprep.subr.mxu0 0.0
        %438 = vmatpush1.msra.mxu0 0.0
        %439 = vmatprep.subr.mxu0 0.0
        %440 = vmatpush1.msra.mxu0 0.0
        %441 = vmatprep.subr.mxu0 0.0
        %442 = vmatpush1.msra.mxu0 0.0
        %443 = vmatprep.subr.mxu0 0.0
        %444 = vmatpush1.msra.mxu0 0.0
        %445 = vmatprep.subr.mxu0 0.0
        %446 = vmatpush1.msra.mxu0 0.0
        %447 = vmatprep.subr.mxu0 0.0
        %448 = vmatpush1.msra.mxu0 0.0
        %449 = vmatprep.subr.mxu0 0.0
        %450 = vmatpush1.msra.mxu0 0.0
        %451 = vmatprep.subr.mxu0 0.0
        %452 = vmatpush1.msra.mxu0 0.0
        %453 = vmatprep.subr.mxu0 0.0
        %454 = vmatpush1.msra.mxu0 0.0
        %455 = vmatprep.subr.mxu0 0.0
        %456 = vmatpush1.msra.mxu0 0.0
        %457 = vmatprep.subr.mxu0 0.0
        %458 = vmatpush1.msra.mxu0 0.0
        %459 = vmatprep.subr.mxu0 0.0
        %460 = vmatpush1.msra.mxu0 0.0
        %461 = vmatprep.subr.mxu0 0.0
        %462 = vmatpush1.msra.mxu0 0.0
        %463 = vmatprep.mubr.f32.mxu0 0.0
        %464 = vmatmul.mubr.f32.gmra.mrb[0].mxu0 %v397
        %v465 = vpop.f32.mrb[0].mxu0
        %v466 = vadd.f32 0.0, %v465
        %v467 = vpop.f32.mrb[0].mxu0
        %v468 = vadd.f32 0.0, %v467
        %469 = vdwg.mxu0
        %v470 = vld [vmem:[%s2] sm:$0xff]
        %472 = vset.pattern.permute.xlu0 0
        %473 = vperm.xlu0 %472, %v470
        %v474 = vpop.permute.xlu0 %473
        %v476 = vmul.f32 %v466, %v474
        %v477 = vmul.f32 %v468, %v474
        %v478 = vld [vmem:[%s3] sm:$0xff]
        %480 = vset.pattern.permute.xlu0 0
        %481 = vperm.xlu0 %480, %v478
        %v482 = vpop.permute.xlu0 %481
        %v484 = vadd.f32 %v476, %v482
        %v485 = vadd.f32 %v477, %v482
        %v486 = vmax.f32 %v484, 0.0
        %v487 = vmax.f32 %v485, 0.0
        %v488 = vmin.f32 %v486, 6.0
        %v489 = vmin.f32 %v487, 6.0
        %490 = vst [vmem:[%s203] sm:$0xff] %v488
        %491 = vst [vmem:[%s203 + $0x8] sm:$0xff] %v489
        %s492 = sand.u32 %s116, 1
        %s493 = scalar_lea.sflag [#allocation5], %s492
        %s494 = sand.u32 %s116, 1
        %s495 = smul.addr %s494, 16
        %s496 = scalar_lea.vmem [#allocation6], %s495
        // Predicated region
        $region41: #{tpu_custom_call.1} parent=35 // pred_check
          %p497 = pneg %p126
        $region42: #{tpu_custom_call.1} parent=35 // pred_check_branch
          %499 = sbr.rel (%p497) target = $region44
        $region43: #{tpu_custom_call.1} parent=35 // pred_region
          %s501 = ssub.s32 256, 256
          %502 = vsyncadd %s493, %s501
          %s503 = smul.addr %s19, 2
          %s504 = smul.addr %s503, 128
          %s505 = scalar_lea.hbm %s4, %s504
          %s507 = sshll.u32 %s496, 4
          %s508 = int_to_ptr.vmem [resolvable:$true] %s507
          %510 = dma.vmem_to_hbm [thread:$0]  %s508, 256, %s505, %s493
        $region44: #{tpu_custom_call.1} parent=35 // pred_fallthru
          _
      $region36: #{tpu_custom_call.1} parent=5 // pred_fallthru
        _
      %p511 = scmp.le.s32.totalorder 2, %s14
      // Predicated region
      $region45: #{tpu_custom_call.1} parent=5 // pred_check
        %p512 = pneg %p511
      $region46: #{tpu_custom_call.1} parent=5 // pred_check_branch
        %514 = sbr.rel (%p512) target = $region48
      $region47: #{tpu_custom_call.1} parent=5 // pred_region
        %s515 = ssub.s32 %s14, 2
        // Predicated region
        $region49: #{tpu_custom_call.1} parent=47 // pred_check
          %p516 = pneg %p132
        $region50: #{tpu_custom_call.1} parent=47 // pred_check_branch
          %518 = sbr.rel (%p516) target = $region52
        $region51: #{tpu_custom_call.1} parent=47 // pred_region
          %s519 = sand.u32 %s117, 1
          %s520 = scalar_lea.sflag [#allocation5], %s519
          %s521 = sand.u32 %s117, 1
          %s522 = smul.addr %s521, 16
          %s523 = scalar_lea.vmem [#allocation6], %s522
          %524 = dma.done %s520, 256
        $region52: #{tpu_custom_call.1} parent=47 // pred_fallthru
          _
      $region48: #{tpu_custom_call.1} parent=5 // pred_fallthru
        _
    $region6: #{tpu_custom_call.1} parent=1 // loop_footer
      %s18 = sadd.s32 1, %s14
    $region7: #{tpu_custom_call.1} parent=1 // loop_footer_branch
      %13 = sbr.rel target = $region3
    $region8: #{tpu_custom_call.1} parent=1 // loop_exit
      _
    %525 = vsyncpa [#allocation4], 1
    %s526 = scalar_lea.sflag [#allocation4], 1
    %527 = vsyncpa %s526, 1
    %528 = vsyncpa [#allocation5], 1
    %s529 = scalar_lea.sflag [#allocation5], 1
    %530 = vsyncpa %s529, 1

</llo_original>
